<compile_context>
chip_gen: v5e
topology: v5e:2x2
jax: 0.10.0
libtpu: 0.0.40
codegen_flags: <defaults>
</compile_context>

<pallas_src>
import functools

import jax
import jax.numpy as jnp
from jax.experimental import pallas as pl
from jax.experimental.pallas import tpu as pltpu


def alphanet_kernel(x_ref, w1_ref, b1_ref, w2_ref, b2_ref, out_ref):
    # ---- fc1 (BN pre-folded into w1/b1) + ReLU: bf16 MXU pass, f32 acc ----
    h = jnp.dot(x_ref[...], w1_ref[...],
                preferred_element_type=jnp.float32)             # (tb, H) f32
    h = jnp.maximum(h + b1_ref[...], 0.0)

    # TODO(synk): Dropout(0.3) is identity in eval mode; training-mode
    # stochastic masking is intentionally not reproduced.

    # ---- output Linear (N=1), emitted lane-dense ----
    # Contract H of w2 (1, H) against H of h (tb, H) -> (1, tb) row.  This is
    # the standard TRANS_B dot_general (same dimension numbers as q @ k.T in
    # flash attention), so the MXU consumes h without an explicit transpose
    # and the result lands directly in a lane-dense row for an unmasked store.
    y = jax.lax.dot_general(
        w2_ref[...], h.astype(jnp.bfloat16),
        dimension_numbers=(((1,), (1,)), ((), ())),
        preferred_element_type=jnp.float32)                     # (1, tb)
    out_ref[...] = (y + b2_ref[0, 0]).astype(out_ref.dtype)


def _choose_batch_tile(batch, tile_b):
    """Per-grid-step batch tile.

    * batch <= tile_b: one full block (block == full dim is always legal).
    * otherwise: a multiple of 16 (bf16 sublane tile), preferring a value that
      divides the batch so the last block is not a mostly-padded tail, and
      guaranteeing >= 2 tiles (lets the "parallel" axis split across the two
      TensorCores on v7x).
    """
    if batch <= tile_b:
        return batch
    tb = max(16, (min(tile_b, batch) // 16) * 16)
    # Look for an evenly dividing tile within ~12.5% of the target size.
    for cand in range(tb, max(16, tb - tb // 8) - 1, -16):
        if batch % cand == 0:
            return cand
    return tb


@functools.partial(jax.jit, static_argnames=("tile_b",))
def alphanet_v1_forward(x, params, *, tile_b=8192):
    """x: (B, F).  params must hold the BN-folded kernel weights:
       w1_folded (F, H) bf16, b1_folded (1, H) f32, w2_row (1, H) bf16,
       b2 (1, 1) f32.
    """
    B, F = x.shape
    H = params["w1_folded"].shape[1]

    # Stream x as bf16: the kernel is bound by HBM reads of x, so halving the
    # bytes is the dominant lever.  (For the full benefit the upstream
    # producer should emit bf16 directly; this cast fuses with the producer.)
    if x.dtype != jnp.bfloat16:
        x = x.astype(jnp.bfloat16)

    tb = _choose_batch_tile(B, int(tile_b))
    num_tiles = pl.cdiv(B, tb)

    # Advisory cost estimate for XLA scheduling around this mem-bound kernel.
    flops = 2 * B * F * H + 4 * B * H
    bytes_accessed = (B * F * 2          # read x (bf16)
                      + B * 4            # write y (f32)
                      + F * H * 2 + H * 4 + H * 2 + 4)   # weights / biases

    out = pl.pallas_call(
        alphanet_kernel,
        # Lane-dense output: one (1, tb) row per batch tile.
        out_shape=jax.ShapeDtypeStruct((num_tiles, tb), jnp.float32),
        grid_spec=pltpu.PrefetchScalarGridSpec(
            num_scalar_prefetch=0,
            grid=(num_tiles,),
            in_specs=[
                # x: streamed per batch tile (double-buffered by Pallas).
                pl.BlockSpec((tb, F), lambda i: (i, 0)),
                # Weights/biases: constant index_map -> resident across tiles.
                pl.BlockSpec((F, H), lambda i: (0, 0)),
                pl.BlockSpec((1, H), lambda i: (0, 0)),
                pl.BlockSpec((1, H), lambda i: (0, 0)),
                # b2 scalar lives in SMEM (a (1,1) VMEM block would pad to a
                # full (8,128) tile + vreg broadcast for no reason).
                pl.BlockSpec(memory_space=pltpu.MemorySpace.SMEM),
            ],
            out_specs=pl.BlockSpec((1, tb), lambda i: (i, 0)),
        ),
        compiler_params=pltpu.CompilerParams(
            # Batch tiles are independent -> shard across TCs on v7x megacore.
            dimension_semantics=("parallel",),
            # Padded-lane VMEM budget at tb=8192 is ~20 MB (x bf16 pads 168 ->
            # 256 lanes, h f32 pads 32 -> 128 lanes); 48 MB leaves headroom
            # under v7x's 64 MiB/TC and is far below v5e/v6e's 128 MiB.
            vmem_limit_bytes=48 * 1024 * 1024,
        ),
        cost_estimate=pl.CostEstimate(
            flops=int(flops), transcendentals=0,
            bytes_accessed=int(bytes_accessed)),
    )(x, params["w1_folded"], params["b1_folded"],
      params["w2_row"], params["b2"])

    # (num_tiles, tb) lane-dense rows -> (B, 1) column; drop tail padding.
    return out.reshape(-1)[:B][:, None]


def make_params(factor_num, fully_connect_layer_neural, key):
    """Deterministic synthetic parameters matching the PyTorch module shapes.

    Returns both the raw (BN + fc1 + out) parameters used by the reference and
    the folded/bf16 parameters consumed by the kernel.
    """
    fc1_neuron = int((factor_num * (factor_num - 1) + 4 * factor_num) * 3 * 2)
    fc2_neuron = fully_connect_layer_neural

    ks = jax.random.split(key, 8)
    eps = 1e-5

    # BatchNorm1d params + running stats (eval mode).
    gamma = 1.0 + 0.1 * jax.random.normal(ks[0], (fc1_neuron,), jnp.float32)
    beta = 0.1 * jax.random.normal(ks[1], (fc1_neuron,), jnp.float32)
    run_mean = 0.05 * jax.random.normal(ks[2], (fc1_neuron,), jnp.float32)
    run_var = 1.0 + 0.1 * jax.random.uniform(ks[3], (fc1_neuron,), jnp.float32)
    bn_scale = gamma / jnp.sqrt(run_var + eps)              # (F,)
    bn_shift = beta - run_mean * bn_scale                   # (F,)

    # Linear layers (stored (in, out); PyTorch keeps (out, in)).
    lim1 = 1.0 / jnp.sqrt(jnp.float32(fc1_neuron))
    w1 = jax.random.uniform(ks[4], (fc1_neuron, fc2_neuron), jnp.float32,
                            minval=-lim1, maxval=lim1)
    b1 = jax.random.uniform(ks[5], (1, fc2_neuron), jnp.float32,
                            minval=-lim1, maxval=lim1)

    lim2 = 1.0 / jnp.sqrt(jnp.float32(fc2_neuron))
    w2 = jax.random.uniform(ks[6], (fc2_neuron, 1), jnp.float32,
                            minval=-lim2, maxval=lim2)
    b2 = jax.random.uniform(ks[7], (1, 1), jnp.float32,
                            minval=-lim2, maxval=lim2)

    # Fold BN (eval-mode affine) into fc1; cast streamed weights to bf16.
    w1_folded = bn_scale[:, None] * w1                       # (F, H)
    b1_folded = (bn_shift @ w1)[None, :] + b1                # (1, H)

    params = dict(
        # Raw params (reference / PyTorch semantics).
        bn_scale=bn_scale.reshape(1, fc1_neuron),
        bn_shift=bn_shift.reshape(1, fc1_neuron),
        w1=w1, b1=b1, w2=w2, b2=b2,
        # Folded params (kernel).
        w1_folded=w1_folded.astype(jnp.bfloat16),
        b1_folded=b1_folded,                                  # f32
        w2_row=w2.reshape(1, fc2_neuron).astype(jnp.bfloat16),
    )
    return params, fc1_neuron, fc2_neuron


def reference_forward(x, params):
    """Pure-JAX f32 reference matching the PyTorch eval-mode forward."""
    xn = x * params["bn_scale"] + params["bn_shift"]
    h = jnp.maximum(xn @ params["w1"] + params["b1"], 0.0)
    return h @ params["w2"] + params["b2"]


if __name__ == "__main__":
    factor_num = 4                       # -> fc1_neuron = (12 + 16) * 6 = 168
    fully_connect_layer_neural = 32      # fc2_neuron
    batch = 8

    key = jax.random.PRNGKey(0)
    pkey, xkey, xkey2 = jax.random.split(key, 3)
    params, fc1_neuron, fc2_neuron = make_params(
        factor_num, fully_connect_layer_neural, pkey)

    # Small-shape check (single grid step, full-dim blocks).
    x = jax.random.normal(xkey, (batch, fc1_neuron), jnp.float32)
    y = jax.block_until_ready(alphanet_v1_forward(x, params))
    y_ref = reference_forward(x, params)
    assert y.shape == (batch, 1)
    assert jnp.allclose(y, y_ref, atol=3e-2, rtol=3e-2), (
        float(jnp.max(jnp.abs(y - y_ref))))

    # Multi-tile check (batch grid, partial last block, lane-dense output
    # flattening back to (B, 1)).
    x2 = jax.random.normal(xkey2, (40, fc1_neuron), jnp.float32)
    y2 = jax.block_until_ready(alphanet_v1_forward(x2, params, tile_b=16))
    y2_ref = reference_forward(x2, params)
    assert y2.shape == (40, 1)
    assert jnp.allclose(y2, y2_ref, atol=3e-2, rtol=3e-2), (
        float(jnp.max(jnp.abs(y2 - y2_ref))))

    print("KERNEL_OK")
</pallas_src>

<mosaic_0001>
module attributes {stable_mosaic.version = 11 : i64} {
  func.func @alphanet_kernel(%arg0: i32, %arg1: memref<8x168xbf16, #tpu.memory_space<vmem>>, %arg2: memref<168x32xbf16, #tpu.memory_space<vmem>>, %arg3: memref<1x32xf32, #tpu.memory_space<vmem>>, %arg4: memref<1x32xbf16, #tpu.memory_space<vmem>>, %arg5: memref<1x1xf32, #tpu.memory_space<smem>>, %arg6: memref<1x8xf32, #tpu.memory_space<vmem>>) attributes {dimension_semantics = [#tpu.dimension_semantics<parallel>], iteration_bounds = array<i64: 1>, scalar_prefetch = 0 : i64, scratch_operands = 0 : i64, tpu.core_type = #tpu.core_type<tc>, window_params = [{transform_indices = @transform_0, window_bounds = array<i64: 8, 168>}, {pipeline_mode = #tpu.pipeline_mode<synchronous>, transform_indices = @transform_1, window_bounds = array<i64: 168, 32>}, {pipeline_mode = #tpu.pipeline_mode<synchronous>, transform_indices = @transform_2, window_bounds = array<i64: 1, 32>}, {pipeline_mode = #tpu.pipeline_mode<synchronous>, transform_indices = @transform_3, window_bounds = array<i64: 1, 32>}, {transform_indices = @transform_4, window_bounds = array<i64: 1, 1>}, {transform_indices = @transform_5, window_bounds = array<i64: 1, 8>}]} {
    %c0 = arith.constant 0 : index
    %c0_0 = arith.constant 0 : index
    %0 = vector.load %arg1[%c0, %c0_0] : memref<8x168xbf16, #tpu.memory_space<vmem>>, vector<8x168xbf16>
    %c0_1 = arith.constant 0 : index
    %c0_2 = arith.constant 0 : index
    %1 = vector.load %arg2[%c0_1, %c0_2] : memref<168x32xbf16, #tpu.memory_space<vmem>>, vector<168x32xbf16>
    %cst = arith.constant dense<0.000000e+00> : vector<8x32xf32>
    %2 = tpu.matmul %0, %1, %cst {dimension_numbers = #tpu.dot_dimension_numbers<[1], [0], [0], [1], [0, 0, 1, 1], [], []>} : vector<8x168xbf16>, vector<168x32xbf16>, vector<8x32xf32> -> vector<8x32xf32>
    %c0_3 = arith.constant 0 : index
    %c0_4 = arith.constant 0 : index
    %3 = vector.load %arg3[%c0_3, %c0_4] : memref<1x32xf32, #tpu.memory_space<vmem>>, vector<1x32xf32>
    %4 = vector.broadcast %3 : vector<1x32xf32> to vector<8x32xf32>
    %5 = arith.addf %2, %4 : vector<8x32xf32>
    %cst_5 = arith.constant 0.000000e+00 : f32
    %6 = vector.broadcast %cst_5 : f32 to vector<8x32xf32>
    %7 = arith.maximumf %5, %6 : vector<8x32xf32>
    %c0_6 = arith.constant 0 : index
    %c0_7 = arith.constant 0 : index
    %8 = vector.load %arg4[%c0_6, %c0_7] : memref<1x32xbf16, #tpu.memory_space<vmem>>, vector<1x32xbf16>
    %9 = arith.truncf %7 : vector<8x32xf32> to vector<8x32xbf16>
    %cst_8 = arith.constant dense<0.000000e+00> : vector<1x8xf32>
    %10 = tpu.matmul %8, %9, %cst_8 {dimension_numbers = #tpu.dot_dimension_numbers<[1], [1], [0], [0], [0, 0, 1, 0], [], []>} : vector<1x32xbf16>, vector<8x32xbf16>, vector<1x8xf32> -> vector<1x8xf32>
    %c0_9 = arith.constant 0 : index
    %c0_10 = arith.constant 0 : index
    %11 = memref.load %arg5[%c0_9, %c0_10] : memref<1x1xf32, #tpu.memory_space<smem>>
    %12 = vector.broadcast %11 : f32 to vector<1x8xf32>
    %13 = arith.addf %10, %12 : vector<1x8xf32>
    %c0_11 = arith.constant 0 : index
    %c0_12 = arith.constant 0 : index
    %14 = vector.load %arg6[%c0_11, %c0_12] : memref<1x8xf32, #tpu.memory_space<vmem>>, vector<1x8xf32>
    tpu.vector_store %arg6[%c0_11, %c0_12], %13 {strides = array<i32>} : memref<1x8xf32, #tpu.memory_space<vmem>>, vector<1x8xf32>,
    return
  }
  func.func @transform_0(%arg0: i32) -> (i32, i32) {
    %c0_i32 = arith.constant 0 : i32
    %c0_i32_0 = arith.constant 0 : i32
    return %arg0, %c0_i32 : i32, i32
  }
  func.func @transform_1(%arg0: i32) -> (i32, i32) {
    %c0_i32 = arith.constant 0 : i32
    %c0_i32_0 = arith.constant 0 : i32
    %c0_i32_1 = arith.constant 0 : i32
    return %c0_i32, %c0_i32_0 : i32, i32
  }
  func.func @transform_2(%arg0: i32) -> (i32, i32) {
    %c0_i32 = arith.constant 0 : i32
    %c0_i32_0 = arith.constant 0 : i32
    %c0_i32_1 = arith.constant 0 : i32
    return %c0_i32, %c0_i32_0 : i32, i32
  }
  func.func @transform_3(%arg0: i32) -> (i32, i32) {
    %c0_i32 = arith.constant 0 : i32
    %c0_i32_0 = arith.constant 0 : i32
    %c0_i32_1 = arith.constant 0 : i32
    return %c0_i32, %c0_i32_0 : i32, i32
  }
  func.func @transform_4(%arg0: i32) -> (i32, i32) {
    %c0_i32 = arith.constant 0 : i32
    %c0_i32_0 = arith.constant 0 : i32
    %c0_i32_1 = arith.constant 0 : i32
    return %c0_i32, %c0_i32_0 : i32, i32
  }
  func.func @transform_5(%arg0: i32) -> (i32, i32) {
    %c0_i32 = arith.constant 0 : i32
    %c0_i32_0 = arith.constant 0 : i32
    return %arg0, %c0_i32 : i32, i32
  }
}

</mosaic_0001>

<llo_original>
// kernel: alphanet_v1_forward.1
$region0: #{alphanet_v1_forward.1}
  #allocation0 [shape = 'u32[]', space=smem, size = 0x4, offset = 0x4, fixed_abs, tag = 'smem constant byte address 0x4 - core index']
  #allocation1 [shape = 'u32[72,128]{1,0:T(1,128)}', space=vmem, size = 0x9000, scoped, tag = 'internal scratch']
  #allocation2 [shape = 'f32[1,1]{1,0:T(1,128)S(6)}', space=smem, size = 0x200, scoped, tag = 'scoped memory for alphanet_v1_forward.1']
  %s0 = inlined_call_operand.vmem [shape: bf16[8,168], index: 0, kind: input, shape index: {}]
  %s1 = inlined_call_operand.vmem [shape: bf16[168,32], index: 1, kind: input, shape index: {}]
  %s2 = inlined_call_operand.vmem [shape: f32[1,32], index: 2, kind: input, shape index: {}]
  %s3 = inlined_call_operand.vmem [shape: bf16[1,32], index: 3, kind: input, shape index: {}]
  %s4 = inlined_call_operand.<no memory space> [shape: f32[1,1], index: 4, kind: input, shape index: {}]
  %s5 = inlined_call_operand.hbm [shape: f32[1,8], index: 5, kind: output, shape index: {}]
  %s6 = sld [smem:[#allocation0]]
  $region30: #{alphanet_v1_forward.1} parent=0
    _
  %s8 = ssub.s32 1, %s6
  %s9 = scalar_select 0, %s8, %s6
  %10 = sst [smem:[#allocation2]] %s4
  $region1: #{alphanet_v1_forward.1} parent=0
    #allocation3 [shape = 'u8[512]{0}', space=vmem, size = 0x400, scoped, tag = 'output window, operand 0, single buffered']
    #allocation4 [shape = 's32[1]{0}', space=sflag, size = 0x4, scoped, tag = 'scoped memory for alphanet_v1_forward.1']
    %11 = vsyncpa [#allocation4], 0
    // Predicated region
    $region2: #{alphanet_v1_forward.1} parent=1 // pred_check
      _
    $region3: #{alphanet_v1_forward.1} parent=1 // pred_check_branch
      %13 = sbr.rel (0) target = $region5
    $region4: #{alphanet_v1_forward.1} parent=1 // pred_region
      _
    $region5: #{alphanet_v1_forward.1} parent=1 // pred_fallthru
      _
    // Predicated region
    $region6: #{alphanet_v1_forward.1} parent=1 // pred_check
      _
    $region7: #{alphanet_v1_forward.1} parent=1 // pred_check_branch
      %15 = sbr.rel (0) target = $region9
    $region8: #{alphanet_v1_forward.1} parent=1 // pred_region
      _
    $region9: #{alphanet_v1_forward.1} parent=1 // pred_fallthru
      _
    // Predicated region
    $region10: #{alphanet_v1_forward.1} parent=1 // pred_check
      _
    $region11: #{alphanet_v1_forward.1} parent=1 // pred_check_branch
      %17 = sbr.rel (0) target = $region13
    $region12: #{alphanet_v1_forward.1} parent=1 // pred_region
      _
    $region13: #{alphanet_v1_forward.1} parent=1 // pred_fallthru
      _
    // Predicated region
    $region14: #{alphanet_v1_forward.1} parent=1 // pred_check
      _
    $region15: #{alphanet_v1_forward.1} parent=1 // pred_check_branch
      %19 = sbr.rel (0) target = $region17
    $region16: #{alphanet_v1_forward.1} parent=1 // pred_region
      _
    $region17: #{alphanet_v1_forward.1} parent=1 // pred_fallthru
      _
    // Predicated region
    $region18: #{alphanet_v1_forward.1} parent=1 // pred_check
      _
    $region19: #{alphanet_v1_forward.1} parent=1 // pred_check_branch
      %21 = sbr.rel (0) target = $region21
    $region20: #{alphanet_v1_forward.1} parent=1 // pred_region
      _
    $region21: #{alphanet_v1_forward.1} parent=1 // pred_fallthru
      _
    %v23 = vld [vmem:[%s0] sm:$0xff]
    %v24 = vld [vmem:[%s1] sm:$0xf]
    %v25 = vld [vmem:[%s1 + $0x4] sm:$0xf]
    %v26 = vld [vmem:[%s1 + $0x8] sm:$0xf]
    %v27 = vld [vmem:[%s1 + $0xc] sm:$0xf]
    %v28 = vld [vmem:[%s1 + $0x10] sm:$0xf]
    %v29 = vld [vmem:[%s1 + $0x14] sm:$0xf]
    %v30 = vld [vmem:[%s1 + $0x18] sm:$0xf]
    %v31 = vld [vmem:[%s1 + $0x1c] sm:$0xf]
    %v32 = vld [vmem:[%s1 + $0x20] sm:$0xf]
    %v33 = vld [vmem:[%s1 + $0x24] sm:$0xf]
    %v34 = vld [vmem:[%s1 + $0x28] sm:$0xf]
    %v35 = vld [vmem:[%s1 + $0x2c] sm:$0xf]
    %v36 = vld [vmem:[%s1 + $0x30] sm:$0xf]
    %v37 = vld [vmem:[%s1 + $0x34] sm:$0xf]
    %v38 = vld [vmem:[%s1 + $0x38] sm:$0xf]
    %v39 = vld [vmem:[%s1 + $0x3c] sm:$0xf]
    %v40 = vld [vmem:[%s1 + $0x40] sm:$0xf]
    %v41 = vld [vmem:[%s1 + $0x44] sm:$0xf]
    %v42 = vld [vmem:[%s1 + $0x48] sm:$0xf]
    %v43 = vld [vmem:[%s1 + $0x4c] sm:$0xf]
    %v44 = vld [vmem:[%s1 + $0x50] sm:$0xf]
    %v45 = vld [vmem:[%s2] sm:$0x1]
    %v47 = vperm.slane %v45, 0
    %v50 = vunpack.c.l.b16 %v23
    %v51 = vunpack.c.h.b16 %v23
    %v52 = vpack.c.b16 %v50, %v50
    %v53 = vpack.c.b16 %v51, %v51
    %v76 = vunpack.c.l.b16 %v24
    %v77 = vunpack.c.l.b16 %v25
    %v78 = vunpack.c.l.b16 %v26
    %v79 = vunpack.c.l.b16 %v27
    %v80 = vunpack.c.l.b16 %v28
    %v81 = vunpack.c.l.b16 %v29
    %v82 = vunpack.c.l.b16 %v30
    %v83 = vunpack.c.l.b16 %v31
    %v84 = vunpack.c.l.b16 %v32
    %v85 = vunpack.c.l.b16 %v33
    %v86 = vunpack.c.l.b16 %v34
    %v87 = vunpack.c.l.b16 %v35
    %v88 = vunpack.c.l.b16 %v36
    %v89 = vunpack.c.l.b16 %v37
    %v90 = vunpack.c.l.b16 %v38
    %v91 = vunpack.c.l.b16 %v39
    %v92 = vunpack.c.l.b16 %v40
    %v93 = vunpack.c.l.b16 %v41
    %v94 = vunpack.c.l.b16 %v42
    %v95 = vunpack.c.l.b16 %v43
    %v96 = vunpack.c.l.b16 %v44
    %v97 = vpack.c.b16 %v77, %v76
    %v98 = vpack.c.b16 %v79, %v78
    %v99 = vpack.c.b16 %v81, %v80
    %v100 = vpack.c.b16 %v83, %v82
    %v101 = vpack.c.b16 %v85, %v84
    %v102 = vpack.c.b16 %v87, %v86
    %v103 = vpack.c.b16 %v89, %v88
    %v104 = vpack.c.b16 %v91, %v90
    %v105 = vpack.c.b16 %v93, %v92
    %v106 = vpack.c.b16 %v95, %v94
    %v107 = vpack.c.b16 %v96, %v96
    %vm118 = vcmask 326656
    %v120 = vsel %vm118, %v53, 0
    %vm122 = vcmask 1043456
    %v124 = vsel %vm122, %v107, 0
    %126 = vmatpush.bf16.msra.mxu0 %v104
    %127 = vmatpush.bf16.msra.mxu0 %v103
    %128 = vmatpush.bf16.msra.mxu0 %v102
    %129 = vmatpush.bf16.msra.mxu0 %v101
    %130 = vmatpush.bf16.msra.mxu0 %v100
    %131 = vmatpush.bf16.msra.mxu0 %v99
    %132 = vmatpush.bf16.msra.mxu0 %v98
    %133 = vmatpush.bf16.msra.mxu0 %v97
    %134 = vmatmul.bf16.gmra.mxu0 %v52
    %v135 = vpop.f32.mrf.mxu0
    %v136 = vadd.f32 %v47, %v135
    %v137 = vpop.f32.mrf.mxu0
    %138 = vdwg.mxu0
    %139 = vmatpush.bf16.msra.mxu0 0
    %140 = vmatpush.bf16.msra.mxu0 0
    %141 = vmatpush.bf16.msra.mxu0 0
    %142 = vmatpush.bf16.msra.mxu0 0
    %143 = vmatpush.bf16.msra.mxu0 0
    %144 = vmatpush.bf16.msra.mxu0 %v124
    %145 = vmatpush.bf16.msra.mxu0 %v106
    %146 = vmatpush.bf16.msra.mxu0 %v105
    %147 = vmatmul.bf16.gmra.mxu0 %v120
    %v148 = vpop.f32.mrf.mxu0
    %v149 = vadd.f32 %v136, %v148
    %v150 = vpop.f32.mrf.mxu0
    %151 = vdwg.mxu0
    %v152 = vmax.f32 %v149, 0.0
    %v153 = vld [vmem:[%s3] sm:$0x1]
    %v154 = vpack.c.bf16 %v152, %v152
    %s155 = sld [smem:[#allocation2]]
    %v156 = vstv %s155
    %vm157 = vcmask 261120
    %v159 = vsel %vm157, %v153, 0
    %v162 = vsel %vm157, %v154, 0
    %164 = vmatpush.bf16.xpose.msra.mxu0 0
    %165 = vmatpush.bf16.xpose.msra.mxu0 0
    %166 = vmatpush.bf16.xpose.msra.mxu0 0
    %167 = vmatpush.bf16.xpose.msra.mxu0 0
    %168 = vmatpush.bf16.xpose.msra.mxu0 0
    %169 = vmatpush.bf16.xpose.msra.mxu0 0
    %170 = vmatpush.bf16.xpose.msra.mxu0 0
    %171 = vmatpush.bf16.xpose.msra.mxu0 %v162
    %172 = vmatmul.bf16.gmra.mxu0 %v159
    %v173 = vpop.f32.mrf.mxu0
    %v174 = vadd.f32 %v156, %v173
    %v175 = vpop.f32.mrf.mxu0
    %176 = vdwg.mxu0
    %vm177 = vcmask 57344
    %178 = vst.msk [vmem:[#allocation3] sm:$0x1] %vm177, %v174
    // Predicated region
    $region22: #{alphanet_v1_forward.1} parent=1 // pred_check
      _
    $region23: #{alphanet_v1_forward.1} parent=1 // pred_check_branch
      %180 = sbr.rel (0) target = $region25
    $region24: #{alphanet_v1_forward.1} parent=1 // pred_region
      %182 = vsyncadd [#allocation4], 0
      %s184 = sshll.u32 [#allocation3], 4
      %s185 = int_to_ptr.vmem [resolvable:$true] %s184
      %s186 = sshll.u32 %s5, 4
      %s187 = int_to_ptr.hbm [resolvable:$true] %s186
      %189 = dma.vmem_to_hbm [thread:$0]  %s185, 16, %s187, [#allocation4]
    $region25: #{alphanet_v1_forward.1} parent=1 // pred_fallthru
      _
    // Predicated region
    $region26: #{alphanet_v1_forward.1} parent=1 // pred_check
      _
    $region27: #{alphanet_v1_forward.1} parent=1 // pred_check_branch
      %191 = sbr.rel (0) target = $region29
    $region28: #{alphanet_v1_forward.1} parent=1 // pred_region
      %193 = dma.done [#allocation4], 16
    $region29: #{alphanet_v1_forward.1} parent=1 // pred_fallthru
      _
    %194 = vsyncpa [#allocation4], 1

</llo_original>
